<compile_context>
chip_gen: v7x
topology: tpu7x:2x2x1
jax: 0.10.0
libtpu: 0.0.40
codegen_flags: <defaults>
</compile_context>

<pallas_src>
import functools

import jax
import jax.numpy as jnp
from jax.experimental import pallas as pl
from jax.experimental.pallas import tpu as pltpu

_INV_SQRT2 = 0.7071067811865476


# ----------------------------------------------------------------------------
# Kernels
# ----------------------------------------------------------------------------
def _layernorm_kernel(x_ref, g_ref, b_ref, o_ref, *, eps):
    # x_ref: (TM, D)   g_ref/b_ref: (1, D) f32
    x = x_ref[...].astype(jnp.float32)
    mu = jnp.mean(x, axis=-1, keepdims=True)
    xc = x - mu
    var = jnp.mean(xc * xc, axis=-1, keepdims=True)
    xn = xc * jax.lax.rsqrt(var + eps)
    o_ref[...] = (xn * g_ref[...] + b_ref[...]).astype(o_ref.dtype)


def _prenorm_ffn_kernel(x_ref, g_ref, bt_ref, w1_ref, b1_ref, w2_ref, b2_ref,
                        o_ref, xn_ref, acc_ref, *, eps, exact_gelu):
    # Grid: (row tiles [parallel], hidden chunks [arbitrary]).
    # x_ref:  (TM, D)        g_ref/bt_ref/b2_ref: (1, D) f32
    # w1_ref: (D, tH)        b1_ref: (1, tH) f32
    # w2_ref: (tH, D)
    # xn_ref: (TM, D) scratch in the MXU dtype, acc_ref: (TM, D) f32 scratch.
    hb = pl.program_id(1)

    @pl.when(hb == 0)
    def _():
        # LayerNorm once per row tile (biased variance, eps inside rsqrt:
        # matches torch.nn.LayerNorm); stash the result in the MXU dtype.
        x = x_ref[...].astype(jnp.float32)
        mu = jnp.mean(x, axis=-1, keepdims=True)
        xc = x - mu
        var = jnp.mean(xc * xc, axis=-1, keepdims=True)
        xn = xc * jax.lax.rsqrt(var + eps)
        xn_ref[...] = (xn * g_ref[...] + bt_ref[...]).astype(xn_ref.dtype)
        acc_ref[...] = jnp.zeros_like(acc_ref)

    # --- Linear 1 panel + GELU ------------------------------------------------
    h = jnp.dot(xn_ref[...], w1_ref[...],
                preferred_element_type=jnp.float32) + b1_ref[...]
    if exact_gelu:
        h = 0.5 * h * (1.0 + jax.lax.erf(h * jnp.float32(_INV_SQRT2)))
    else:
        # tanh approximation -> EUP slot (co-issues with MXU/VPU work).
        h = jax.nn.gelu(h, approximate=True)

    # --- Linear 2 panel, f32 accumulation over hidden chunks ------------------
    acc_ref[...] += jnp.dot(h.astype(w2_ref.dtype), w2_ref[...],
                            preferred_element_type=jnp.float32)

    @pl.when(hb == pl.num_programs(1) - 1)
    def _():
        o_ref[...] = (acc_ref[...] + b2_ref[...]).astype(o_ref.dtype)


# ----------------------------------------------------------------------------
# Spec / tiling helpers
# ----------------------------------------------------------------------------
def _spec(block_shape, index_map, *, single=False):
    """BlockSpec; optionally single-buffered (constant index_map => the block
    is never re-fetched, so double-buffering is pure VMEM waste)."""
    if single:
        try:
            return pl.BlockSpec(block_shape, index_map,
                                pipeline_mode=pl.Buffered(1))
        except (TypeError, AttributeError):  # very old JAX: fall back quietly
            return pl.BlockSpec(block_shape, index_map)
    return pl.BlockSpec(block_shape, index_map)


def _row_tiling(rows, tile_m):
    """Sublane-aligned row tile; >=2 grid steps whenever possible so the
    'parallel' row axis is actually split across v7x's two TensorCores."""
    if rows <= 8:
        return rows                      # full-dim block satisfies (8,128) rule
    tm = max(8, (min(tile_m, rows) // 8) * 8)
    if pl.cdiv(rows, tm) < 2:
        tm = max(8, ((tm // 2 + 7) // 8) * 8)
    return tm


def _hidden_tiling(H, hidden_tile):
    """Largest multiple of 128 <= hidden_tile that EVENLY divides H.  A ragged
    hidden chunk would feed garbage columns into the accumulating matmul, so
    if no such tile exists we fall back to full residency."""
    if H <= hidden_tile:
        return H
    t = (min(hidden_tile, H) // 128) * 128
    while t >= 128:
        if H % t == 0:
            return t
        t -= 128
    return H


def _vmem_limit_bytes(requested):
    """Cap the VMEM budget at ~85% of physical capacity (leave Mosaic
    internal-scratch headroom; never hand out the full 64 MiB on v7x)."""
    try:
        cap = pltpu.get_tpu_info().vmem_capacity_bytes
    except Exception:  # pragma: no cover - older JAX
        cap = 64 * 1024 * 1024
    return int(min(max(requested, 32 * 1024 * 1024), int(cap * 0.85)))


# ----------------------------------------------------------------------------
# Wrappers
# ----------------------------------------------------------------------------
def layer_norm(x, gamma, beta, *, eps=1e-5, tile_m=512):
    """LayerNorm over the last axis of x (any leading shape).  Mem-bound, so
    the default row tile is large (512).  No pad/slice: the ragged last block
    computes on stale rows whose writes are masked (rows are independent)."""
    D = x.shape[-1]
    lead = x.shape[:-1]
    rows = 1
    for s in lead:
        rows *= int(s)
    x2d = x.reshape(rows, D)
    tm = _row_tiling(rows, tile_m)

    out2d = pl.pallas_call(
        functools.partial(_layernorm_kernel, eps=eps),
        out_shape=jax.ShapeDtypeStruct((rows, D), x.dtype),
        grid=(pl.cdiv(rows, tm),),
        in_specs=[
            pl.BlockSpec((tm, D), lambda i: (i, 0)),
            _spec((1, D), lambda i: (0, 0), single=True),   # gamma: resident
            _spec((1, D), lambda i: (0, 0), single=True),   # beta:  resident
        ],
        out_specs=pl.BlockSpec((tm, D), lambda i: (i, 0)),
        compiler_params=pltpu.CompilerParams(
            dimension_semantics=("parallel",)),
    )(x2d,
      gamma.reshape(1, D).astype(jnp.float32),
      beta.reshape(1, D).astype(jnp.float32))

    return out2d.reshape(lead + (D,))


def pre_norm(x, gamma, beta, fn, *, eps=1e-5, tile_m=512, **kwargs):
    """Faithful PreNorm.forward: fn(LayerNorm(x), **kwargs).  `fn` is any JAX
    callable (the attention / feed-forward block wrapped by PreNorm)."""
    return fn(layer_norm(x, gamma, beta, eps=eps, tile_m=tile_m), **kwargs)


def pre_norm_feed_forward(x, gamma, beta, w1, b1, w2, b2, *,
                          eps=1e-5, tile_m=256, hidden_tile=512,
                          exact_gelu=False, weight_dtype=None):
    """Fused PreNorm(dim, FeedForward(dim, hidden)) forward.

    x: (..., D). gamma/beta: (D,). w1: (D, H), b1: (H,), w2: (H, D), b2: (D,).
    weight_dtype: pass jnp.bfloat16 in production to feed the MXU bf16 on
      both matmuls (accumulation stays f32); left None here so the f32 demo
      matches the f32 reference at tight tolerance.
    """
    D = x.shape[-1]
    H = w1.shape[1]
    lead = x.shape[:-1]
    rows = 1
    for s in lead:
        rows *= int(s)
    x2d = x.reshape(rows, D)

    if weight_dtype is not None:
        w1 = w1.astype(weight_dtype)
        w2 = w2.astype(weight_dtype)
    mxu_dtype = w1.dtype

    tm = _row_tiling(rows, tile_m)
    tH = _hidden_tiling(H, hidden_tile)
    row_steps = pl.cdiv(rows, tm)
    h_steps = H // tH
    multi_h = h_steps > 1

    # VMEM budget estimate (x/out double-buffered, weight panels double-
    # buffered only when they actually change per grid step, scratches, and
    # f32 GELU intermediate headroom).
    isz = x2d.dtype.itemsize
    wsz = w1.dtype.itemsize
    wbuf = 2 if multi_h else 1
    est = (2 * tm * D * isz + 2 * tm * D * isz
           + wbuf * (D * tH + tH * D) * wsz
           + wbuf * tH * 4 + 3 * D * 4
           + tm * D * wsz + tm * D * 4
           + 2 * tm * tH * 4)
    vmem_limit = _vmem_limit_bytes(int(1.5 * est))

    cost = pl.CostEstimate(
        flops=4 * rows * D * H,
        transcendentals=rows * H,
        bytes_accessed=(2 * rows * D * isz + 2 * D * H * wsz
                        + (H + 3 * D) * 4))

    out2d = pl.pallas_call(
        functools.partial(_prenorm_ffn_kernel, eps=eps, exact_gelu=exact_gelu),
        out_shape=jax.ShapeDtypeStruct((rows, D), x.dtype),
        grid=(row_steps, h_steps),
        in_specs=[
            pl.BlockSpec((tm, D), lambda i, hb: (i, 0)),                  # x
            _spec((1, D), lambda i, hb: (0, 0), single=True),             # gamma
            _spec((1, D), lambda i, hb: (0, 0), single=True),             # beta
            _spec((D, tH), lambda i, hb: (0, hb), single=not multi_h),    # w1
            _spec((1, tH), lambda i, hb: (0, hb), single=not multi_h),    # b1
            _spec((tH, D), lambda i, hb: (hb, 0), single=not multi_h),    # w2
            _spec((1, D), lambda i, hb: (0, 0), single=True),             # b2
        ],
        out_specs=pl.BlockSpec((tm, D), lambda i, hb: (i, 0)),
        scratch_shapes=[pltpu.VMEM((tm, D), mxu_dtype),      # LayerNorm result
                        pltpu.VMEM((tm, D), jnp.float32)],   # f32 accumulator
        compiler_params=pltpu.CompilerParams(
            dimension_semantics=("parallel", "arbitrary"),
            vmem_limit_bytes=vmem_limit),
        cost_estimate=cost,
    )(x2d,
      gamma.reshape(1, D).astype(jnp.float32),
      beta.reshape(1, D).astype(jnp.float32),
      w1,
      b1.reshape(1, H).astype(jnp.float32),
      w2,
      b2.reshape(1, D).astype(jnp.float32))

    return out2d.reshape(lead + (D,))


# ----------------------------------------------------------------------------
# References (pure JAX)
# ----------------------------------------------------------------------------
def _layernorm_ref(x, gamma, beta, eps=1e-5):
    mu = jnp.mean(x, axis=-1, keepdims=True)
    var = jnp.mean((x - mu) ** 2, axis=-1, keepdims=True)
    return (x - mu) * jax.lax.rsqrt(var + eps) * gamma + beta


def _prenorm_ffn_ref(x, gamma, beta, w1, b1, w2, b2, eps=1e-5, exact_gelu=False):
    xn = _layernorm_ref(x, gamma, beta, eps)
    h = jnp.dot(xn, w1) + b1
    h = jax.nn.gelu(h, approximate=not exact_gelu)
    return jnp.dot(h, w2) + b2


# ----------------------------------------------------------------------------
# Demo
# ----------------------------------------------------------------------------
if __name__ == "__main__":
    B, N, dim, hidden = 2, 8, 32, 64

    key = jax.random.PRNGKey(0)
    kx, kg, kb, kw1, kb1, kw2, kb2 = jax.random.split(key, 7)

    x = jax.random.normal(kx, (B, N, dim), dtype=jnp.float32)
    gamma = 1.0 + 0.1 * jax.random.normal(kg, (dim,), dtype=jnp.float32)
    beta = 0.1 * jax.random.normal(kb, (dim,), dtype=jnp.float32)

    lim1 = 1.0 / jnp.sqrt(dim)
    lim2 = 1.0 / jnp.sqrt(hidden)
    w1 = jax.random.uniform(kw1, (dim, hidden), minval=-lim1, maxval=lim1,
                            dtype=jnp.float32)
    b1 = jax.random.uniform(kb1, (hidden,), minval=-lim1, maxval=lim1,
                            dtype=jnp.float32)
    w2 = jax.random.uniform(kw2, (hidden, dim), minval=-lim2, maxval=lim2,
                            dtype=jnp.float32)
    b2 = jax.random.uniform(kb2, (dim,), minval=-lim2, maxval=lim2,
                            dtype=jnp.float32)

    # Fused PreNorm + FeedForward.  tile_m=8 so the 16-row demo exercises a
    # multi-step row grid (production default is 256, hidden chunked at 512).
    out = pre_norm_feed_forward(x, gamma, beta, w1, b1, w2, b2, tile_m=8)
    out = jax.block_until_ready(out)
    ref = _prenorm_ffn_ref(x, gamma, beta, w1, b1, w2, b2, exact_gelu=False)
    assert out.shape == (B, N, dim)
    assert jnp.allclose(out, ref, atol=2e-5, rtol=2e-5)

    # Exact-erf GELU variant (numerics of torch nn.GELU default).
    out_e = pre_norm_feed_forward(x, gamma, beta, w1, b1, w2, b2, tile_m=8,
                                  exact_gelu=True)
    out_e = jax.block_until_ready(out_e)
    ref_e = _prenorm_ffn_ref(x, gamma, beta, w1, b1, w2, b2, exact_gelu=True)
    assert jnp.allclose(out_e, ref_e, atol=2e-5, rtol=2e-5)

    # Generic PreNorm path (arbitrary fn) — here fn = identity.
    ln = pre_norm(x, gamma, beta, fn=lambda y: y, tile_m=8)
    ln = jax.block_until_ready(ln)
    assert jnp.allclose(ln, _layernorm_ref(x, gamma, beta), atol=2e-5, rtol=2e-5)

    print("KERNEL_OK")
</pallas_src>

<mosaic_0001>
module attributes {stable_mosaic.version = 11 : i64} {
  func.func @_prenorm_ffn_kernel(%arg0: i32, %arg1: i32, %arg2: memref<8x32xf32, #tpu.memory_space<vmem>>, %arg3: memref<1x32xf32, #tpu.memory_space<vmem>>, %arg4: memref<1x32xf32, #tpu.memory_space<vmem>>, %arg5: memref<32x64xf32, #tpu.memory_space<vmem>>, %arg6: memref<1x64xf32, #tpu.memory_space<vmem>>, %arg7: memref<64x32xf32, #tpu.memory_space<vmem>>, %arg8: memref<1x32xf32, #tpu.memory_space<vmem>>, %arg9: memref<8x32xf32, #tpu.memory_space<vmem>>, %arg10: memref<8x32xf32, #tpu.memory_space<vmem>>, %arg11: memref<8x32xf32, #tpu.memory_space<vmem>>) attributes {dimension_semantics = [#tpu.dimension_semantics<parallel>, #tpu.dimension_semantics<arbitrary>], iteration_bounds = array<i64: 2, 1>, scalar_prefetch = 0 : i64, scratch_operands = 2 : i64, tpu.core_type = #tpu.core_type<tc>, window_params = [{transform_indices = @transform_0, window_bounds = array<i64: 8, 32>}, {pipeline_mode = #tpu.pipeline_mode<synchronous>, transform_indices = @transform_1, window_bounds = array<i64: 1, 32>}, {pipeline_mode = #tpu.pipeline_mode<synchronous>, transform_indices = @transform_2, window_bounds = array<i64: 1, 32>}, {pipeline_mode = #tpu.pipeline_mode<synchronous>, transform_indices = @transform_3, window_bounds = array<i64: 32, 64>}, {pipeline_mode = #tpu.pipeline_mode<synchronous>, transform_indices = @transform_4, window_bounds = array<i64: 1, 64>}, {pipeline_mode = #tpu.pipeline_mode<synchronous>, transform_indices = @transform_5, window_bounds = array<i64: 64, 32>}, {pipeline_mode = #tpu.pipeline_mode<synchronous>, transform_indices = @transform_6, window_bounds = array<i64: 1, 32>}, {transform_indices = @transform_7, window_bounds = array<i64: 8, 32>}]} {
    %c0_i32 = arith.constant 0 : i32
    %0 = arith.cmpi eq, %arg1, %c0_i32 : i32
    %1 = arith.extui %0 : i1 to i32
    %c0_i32_0 = arith.constant 0 : i32
    %2 = arith.cmpi ne, %1, %c0_i32_0 : i32
    scf.if %2 {
      %c0_19 = arith.constant 0 : index
      %c0_20 = arith.constant 0 : index
      %30 = vector.load %arg2[%c0_19, %c0_20] : memref<8x32xf32, #tpu.memory_space<vmem>>, vector<8x32xf32>
      %cst_21 = arith.constant dense<0.000000e+00> : vector<8xf32>
      %31 = vector.multi_reduction <add>, %30, %cst_21 [1] : vector<8x32xf32> to vector<8xf32>
      %32 = vector.shape_cast %31 : vector<8xf32> to vector<8x1xf32>
      %cst_22 = arith.constant 3.200000e+01 : f32
      %33 = vector.broadcast %cst_22 : f32 to vector<8x1xf32>
      %34 = arith.divf %32, %33 : vector<8x1xf32>
      %35 = vector.broadcast %34 : vector<8x1xf32> to vector<8x32xf32>
      %36 = arith.subf %30, %35 : vector<8x32xf32>
      %37 = arith.mulf %36, %36 : vector<8x32xf32>
      %cst_23 = arith.constant dense<0.000000e+00> : vector<8xf32>
      %38 = vector.multi_reduction <add>, %37, %cst_23 [1] : vector<8x32xf32> to vector<8xf32>
      %39 = vector.shape_cast %38 : vector<8xf32> to vector<8x1xf32>
      %cst_24 = arith.constant 3.200000e+01 : f32
      %40 = vector.broadcast %cst_24 : f32 to vector<8x1xf32>
      %41 = arith.divf %39, %40 : vector<8x1xf32>
      %cst_25 = arith.constant 9.99999974E-6 : f32
      %42 = vector.broadcast %cst_25 : f32 to vector<8x1xf32>
      %43 = arith.addf %41, %42 : vector<8x1xf32>
      %44 = math.rsqrt %43 : vector<8x1xf32>
      %45 = vector.broadcast %44 : vector<8x1xf32> to vector<8x32xf32>
      %46 = arith.mulf %36, %45 : vector<8x32xf32>
      %c0_26 = arith.constant 0 : index
      %c0_27 = arith.constant 0 : index
      %47 = vector.load %arg3[%c0_26, %c0_27] : memref<1x32xf32, #tpu.memory_space<vmem>>, vector<1x32xf32>
      %48 = vector.broadcast %47 : vector<1x32xf32> to vector<8x32xf32>
      %49 = arith.mulf %46, %48 : vector<8x32xf32>
      %c0_28 = arith.constant 0 : index
      %c0_29 = arith.constant 0 : index
      %50 = vector.load %arg4[%c0_28, %c0_29] : memref<1x32xf32, #tpu.memory_space<vmem>>, vector<1x32xf32>
      %51 = vector.broadcast %50 : vector<1x32xf32> to vector<8x32xf32>
      %52 = arith.addf %49, %51 : vector<8x32xf32>
      %c0_30 = arith.constant 0 : index
      %c0_31 = arith.constant 0 : index
      %53 = vector.load %arg10[%c0_30, %c0_31] : memref<8x32xf32, #tpu.memory_space<vmem>>, vector<8x32xf32>
      tpu.vector_store %arg10[%c0_30, %c0_31], %52 {strides = array<i32>} : memref<8x32xf32, #tpu.memory_space<vmem>>, vector<8x32xf32>,
      %cst_32 = arith.constant 0.000000e+00 : f32
      %54 = vector.broadcast %cst_32 : f32 to vector<8x32xf32>
      %c0_33 = arith.constant 0 : index
      %c0_34 = arith.constant 0 : index
      %55 = vector.load %arg11[%c0_33, %c0_34] : memref<8x32xf32, #tpu.memory_space<vmem>>, vector<8x32xf32>
      tpu.vector_store %arg11[%c0_33, %c0_34], %54 {strides = array<i32>} : memref<8x32xf32, #tpu.memory_space<vmem>>, vector<8x32xf32>,
    } else {
    }
    %c0 = arith.constant 0 : index
    %c0_1 = arith.constant 0 : index
    %3 = vector.load %arg10[%c0, %c0_1] : memref<8x32xf32, #tpu.memory_space<vmem>>, vector<8x32xf32>
    %c0_2 = arith.constant 0 : index
    %c0_3 = arith.constant 0 : index
    %4 = vector.load %arg5[%c0_2, %c0_3] : memref<32x64xf32, #tpu.memory_space<vmem>>, vector<32x64xf32>
    %cst = arith.constant dense<0.000000e+00> : vector<8x64xf32>
    %5 = tpu.matmul %3, %4, %cst {dimension_numbers = #tpu.dot_dimension_numbers<[1], [0], [0], [1], [0, 0, 1, 1], [], []>} : vector<8x32xf32>, vector<32x64xf32>, vector<8x64xf32> -> vector<8x64xf32>
    %c0_4 = arith.constant 0 : index
    %c0_5 = arith.constant 0 : index
    %6 = vector.load %arg6[%c0_4, %c0_5] : memref<1x64xf32, #tpu.memory_space<vmem>>, vector<1x64xf32>
    %7 = vector.broadcast %6 : vector<1x64xf32> to vector<8x64xf32>
    %8 = arith.addf %5, %7 : vector<8x64xf32>
    %9 = arith.mulf %8, %8 : vector<8x64xf32>
    %10 = arith.mulf %8, %9 : vector<8x64xf32>
    %cst_6 = arith.constant 4.471500e-02 : f32
    %11 = vector.broadcast %cst_6 : f32 to vector<8x64xf32>
    %12 = arith.mulf %11, %10 : vector<8x64xf32>
    %13 = arith.addf %8, %12 : vector<8x64xf32>
    %cst_7 = arith.constant 0.797884583 : f32
    %14 = vector.broadcast %cst_7 : f32 to vector<8x64xf32>
    %15 = arith.mulf %14, %13 : vector<8x64xf32>
    %16 = math.tanh %15 : vector<8x64xf32>
    %cst_8 = arith.constant 1.000000e+00 : f32
    %17 = vector.broadcast %cst_8 : f32 to vector<8x64xf32>
    %18 = arith.addf %17, %16 : vector<8x64xf32>
    %cst_9 = arith.constant 5.000000e-01 : f32
    %19 = vector.broadcast %cst_9 : f32 to vector<8x64xf32>
    %20 = arith.mulf %19, %18 : vector<8x64xf32>
    %21 = arith.mulf %8, %20 : vector<8x64xf32>
    %c0_10 = arith.constant 0 : index
    %c0_11 = arith.constant 0 : index
    %22 = vector.load %arg11[%c0_10, %c0_11] : memref<8x32xf32, #tpu.memory_space<vmem>>, vector<8x32xf32>
    %c0_12 = arith.constant 0 : index
    %c0_13 = arith.constant 0 : index
    %23 = vector.load %arg7[%c0_12, %c0_13] : memref<64x32xf32, #tpu.memory_space<vmem>>, vector<64x32xf32>
    %cst_14 = arith.constant dense<0.000000e+00> : vector<8x32xf32>
    %24 = tpu.matmul %21, %23, %cst_14 {dimension_numbers = #tpu.dot_dimension_numbers<[1], [0], [0], [1], [0, 0, 1, 1], [], []>} : vector<8x64xf32>, vector<64x32xf32>, vector<8x32xf32> -> vector<8x32xf32>
    %25 = arith.addf %22, %24 : vector<8x32xf32>
    %c0_15 = arith.constant 0 : index
    %c0_16 = arith.constant 0 : index
    %26 = vector.load %arg11[%c0_15, %c0_16] : memref<8x32xf32, #tpu.memory_space<vmem>>, vector<8x32xf32>
    tpu.vector_store %arg11[%c0_15, %c0_16], %25 {strides = array<i32>} : memref<8x32xf32, #tpu.memory_space<vmem>>, vector<8x32xf32>,
    %c0_i32_17 = arith.constant 0 : i32
    %27 = arith.cmpi eq, %arg1, %c0_i32_17 : i32
    %28 = arith.extui %27 : i1 to i32
    %c0_i32_18 = arith.constant 0 : i32
    %29 = arith.cmpi ne, %28, %c0_i32_18 : i32
    scf.if %29 {
      %c0_19 = arith.constant 0 : index
      %c0_20 = arith.constant 0 : index
      %30 = vector.load %arg11[%c0_19, %c0_20] : memref<8x32xf32, #tpu.memory_space<vmem>>, vector<8x32xf32>
      %c0_21 = arith.constant 0 : index
      %c0_22 = arith.constant 0 : index
      %31 = vector.load %arg8[%c0_21, %c0_22] : memref<1x32xf32, #tpu.memory_space<vmem>>, vector<1x32xf32>
      %32 = vector.broadcast %31 : vector<1x32xf32> to vector<8x32xf32>
      %33 = arith.addf %30, %32 : vector<8x32xf32>
      %c0_23 = arith.constant 0 : index
      %c0_24 = arith.constant 0 : index
      %34 = vector.load %arg9[%c0_23, %c0_24] : memref<8x32xf32, #tpu.memory_space<vmem>>, vector<8x32xf32>
      tpu.vector_store %arg9[%c0_23, %c0_24], %33 {strides = array<i32>} : memref<8x32xf32, #tpu.memory_space<vmem>>, vector<8x32xf32>,
    } else {
    }
    return
  }
  func.func @transform_0(%arg0: i32, %arg1: i32) -> (i32, i32) {
    %c0_i32 = arith.constant 0 : i32
    %c0_i32_0 = arith.constant 0 : i32
    return %arg0, %c0_i32 : i32, i32
  }
  func.func @transform_1(%arg0: i32, %arg1: i32) -> (i32, i32) {
    %c0_i32 = arith.constant 0 : i32
    %c0_i32_0 = arith.constant 0 : i32
    %c0_i32_1 = arith.constant 0 : i32
    return %c0_i32, %c0_i32_0 : i32, i32
  }
  func.func @transform_2(%arg0: i32, %arg1: i32) -> (i32, i32) {
    %c0_i32 = arith.constant 0 : i32
    %c0_i32_0 = arith.constant 0 : i32
    %c0_i32_1 = arith.constant 0 : i32
    return %c0_i32, %c0_i32_0 : i32, i32
  }
  func.func @transform_3(%arg0: i32, %arg1: i32) -> (i32, i32) {
    %c0_i32 = arith.constant 0 : i32
    %c0_i32_0 = arith.constant 0 : i32
    return %c0_i32, %arg1 : i32, i32
  }
  func.func @transform_4(%arg0: i32, %arg1: i32) -> (i32, i32) {
    %c0_i32 = arith.constant 0 : i32
    %c0_i32_0 = arith.constant 0 : i32
    return %c0_i32, %arg1 : i32, i32
  }
  func.func @transform_5(%arg0: i32, %arg1: i32) -> (i32, i32) {
    %c0_i32 = arith.constant 0 : i32
    %c0_i32_0 = arith.constant 0 : i32
    return %arg1, %c0_i32 : i32, i32
  }
  func.func @transform_6(%arg0: i32, %arg1: i32) -> (i32, i32) {
    %c0_i32 = arith.constant 0 : i32
    %c0_i32_0 = arith.constant 0 : i32
    %c0_i32_1 = arith.constant 0 : i32
    return %c0_i32, %c0_i32_0 : i32, i32
  }
  func.func @transform_7(%arg0: i32, %arg1: i32) -> (i32, i32) {
    %c0_i32 = arith.constant 0 : i32
    %c0_i32_0 = arith.constant 0 : i32
    return %arg0, %c0_i32 : i32, i32
  }
}

</mosaic_0001>

<llo_original>
// kernel: tpu_custom_call.1
$region0: #{tpu_custom_call.1}
  #allocation0 [shape = 'u32[]', space=smem, size = 0x4, offset = 0x4, fixed_abs, tag = 'smem constant byte address 0x4 - core index']
  #allocation1 [shape = 'u32[144,128]{1,0:T(1,128)}', space=vmem, size = 0x12000, scoped, tag = 'internal scratch']
  #allocation2 [shape = 'f32[8,32]{1,0:T(8,128)}', space=vmem, size = 0x1000, scoped, tag = 'scratch operand']
  #allocation3 [shape = 'f32[8,32]{1,0:T(8,128)}', space=vmem, size = 0x1000, scoped, tag = 'scratch operand']
  %s0 = inlined_call_operand.vmem [shape: f32[16,32], index: 0, kind: input, shape index: {}]
  %s1 = inlined_call_operand.vmem [shape: f32[1,32], index: 1, kind: input, shape index: {}]
  %s2 = inlined_call_operand.vmem [shape: f32[1,32], index: 2, kind: input, shape index: {}]
  %s3 = inlined_call_operand.vmem [shape: f32[32,64], index: 3, kind: input, shape index: {}]
  %s4 = inlined_call_operand.vmem [shape: f32[1,64], index: 4, kind: input, shape index: {}]
  %s5 = inlined_call_operand.vmem [shape: f32[64,32], index: 5, kind: input, shape index: {}]
  %s6 = inlined_call_operand.vmem [shape: f32[1,32], index: 6, kind: input, shape index: {}]
  %s7 = inlined_call_operand.hbm [shape: f32[16,32], index: 7, kind: output, shape index: {}]
  %s8 = sld [smem:[#allocation0]]
  $region69: #{tpu_custom_call.1} parent=0
    _
  %s10 = ssub.s32 1, %s8
  %s11 = scalar_select 0, %s10, %s8
  $region1: #{tpu_custom_call.1} parent=0
    #allocation4 [shape = 'u8[8192]{0}', space=vmem, size = 0x2000, scoped, tag = 'output window, operand 0']
    #allocation5 [shape = 's32[2]{0}', space=sflag, size = 0x8, scoped, tag = 'scoped memory for tpu_custom_call.1']
    %12 = vsyncpa [#allocation5], 0
    %s13 = scalar_lea.sflag [#allocation5], 1
    %14 = vsyncpa %s13, 0
    loop: start=0, step=1, limit=4
    $region2: #{tpu_custom_call.1} parent=1 // loop_pre_header
      _
    $region3: #{tpu_custom_call.1} parent=1 // loop_header
      %s16 = sphi 0, %s20
      %p17 = scmp.ge.s32.totalorder %s16, 4
      %s23 = sphi 0, %s35
      %s24 = sphi 0, %s31
      %s25 = sphi 0, %s23
      %s26 = sphi 0, %s24
      %s27 = sphi 0, %s25
      %s28 = sphi 0, %s26
      %s38 = sphi 0, %s40
      %s41 = sphi 0, %s38
      %s42 = sphi 0, %s41
      %s58 = sphi 0, %s42
      %s62 = sphi 0, %s62
      %s64 = sphi 0, %s62
      %s65 = sphi 0, %s64
      %s79 = sphi 0, %s65
      %s83 = sphi 0, %s83
      %s85 = sphi 0, %s83
      %s86 = sphi 0, %s85
      %s100 = sphi 0, %s86
      %s106 = sphi 0, %s108
      %s109 = sphi 0, %s106
      %s110 = sphi 0, %s109
      %s126 = sphi 0, %s110
      %s132 = sphi 0, %s134
      %s135 = sphi 0, %s132
      %s136 = sphi 0, %s135
      %s152 = sphi 0, %s136
      %s158 = sphi 0, %s160
      %s161 = sphi 0, %s158
      %s162 = sphi 0, %s161
      %s178 = sphi 0, %s162
      %s182 = sphi 0, %s182
      %s184 = sphi 0, %s182
      %s185 = sphi 0, %s184
      %s199 = sphi 0, %s185
      %s205 = sphi 0, %s207
      %s208 = sphi 0, %s205
      %s209 = sphi 0, %s208
      %s225 = sphi 0, %s209
    $region4: #{tpu_custom_call.1} parent=1 // loop_header_branch
      %19 = sbr.rel (%p17) target = $region8
    $region5: #{tpu_custom_call.1} parent=1 // loop_body
      %s21 = ssub.s32 %s16, 1
      %s22 = ssub.s32 %s16, 2
      %s29 = sadd.s32 1, %s24
      %p30 = scmp.ge.s32.totalorder %s29, 1
      %s31 = scalar_select %p30, 0, %s29
      %s32 = sadd.s32 1, %s23
      %s33 = scalar_select %p30, %s32, %s23
      %p34 = scmp.ge.s32.totalorder %s33, 2
      %s35 = scalar_select %p34, 0, %s33
      %s36 = ssub.s32 %s23, %s35
      %p37 = scmp.eq.s32.totalorder %s36, 0
      %s39 = sadd.s32 %s38, 1
      %s40 = scalar_select %p37, %s38, %s39
      %p43 = pneg %p37
      %p44 = scmp.eq.s32.totalorder %s16, 1
      %p45 = por %p43, %p44
      %p46 = scmp.ne.s32.totalorder %s38, %s41
      %p47 = scmp.eq.s32.totalorder %s16, 0
      %p48 = por %p46, %p47
      %p49 = scmp.ne.s32.totalorder %s38, %s41
      %p50 = scmp.eq.s32.totalorder %s21, 1
      %p51 = por %p49, %p50
      %p52 = scmp.ne.s32.totalorder %s41, %s42
      %p53 = scmp.eq.s32.totalorder %s21, 0
      %p54 = por %p52, %p53
      %p55 = scmp.ne.s32.totalorder %s41, %s42
      %p56 = scmp.eq.s32.totalorder %s22, 1
      %p57 = por %p55, %p56
      %p59 = scmp.ne.s32.totalorder %s42, %s58
      %p60 = scmp.eq.s32.totalorder %s22, 0
      %p61 = por %p59, %p60
      %s63 = sadd.s32 %s62, 1
      %p66 = scmp.eq.s32.totalorder %s16, 1
      %p67 = scmp.ne.s32.totalorder %s62, %s64
      %p68 = scmp.eq.s32.totalorder %s16, 0
      %p69 = por %p67, %p68
      %p70 = scmp.ne.s32.totalorder %s62, %s64
      %p71 = scmp.eq.s32.totalorder %s21, 1
      %p72 = por %p70, %p71
      %p73 = scmp.ne.s32.totalorder %s64, %s65
      %p74 = scmp.eq.s32.totalorder %s21, 0
      %p75 = por %p73, %p74
      %p76 = scmp.ne.s32.totalorder %s64, %s65
      %p77 = scmp.eq.s32.totalorder %s22, 1
      %p78 = por %p76, %p77
      %p80 = scmp.ne.s32.totalorder %s65, %s79
      %p81 = scmp.eq.s32.totalorder %s22, 0
      %p82 = por %p80, %p81
      %s84 = sadd.s32 %s83, 1
      %p87 = scmp.eq.s32.totalorder %s16, 1
      %p88 = scmp.ne.s32.totalorder %s83, %s85
      %p89 = scmp.eq.s32.totalorder %s16, 0
      %p90 = por %p88, %p89
      %p91 = scmp.ne.s32.totalorder %s83, %s85
      %p92 = scmp.eq.s32.totalorder %s21, 1
      %p93 = por %p91, %p92
      %p94 = scmp.ne.s32.totalorder %s85, %s86
      %p95 = scmp.eq.s32.totalorder %s21, 0
      %p96 = por %p94, %p95
      %p97 = scmp.ne.s32.totalorder %s85, %s86
      %p98 = scmp.eq.s32.totalorder %s22, 1
      %p99 = por %p97, %p98
      %p101 = scmp.ne.s32.totalorder %s86, %s100
      %p102 = scmp.eq.s32.totalorder %s22, 0
      %p103 = por %p101, %p102
      %s104 = ssub.s32 %s24, %s31
      %p105 = scmp.eq.s32.totalorder %s104, 0
      %s107 = sadd.s32 %s106, 1
      %s108 = scalar_select %p105, %s106, %s107
      %p111 = pneg %p105
      %p112 = scmp.eq.s32.totalorder %s16, 1
      %p113 = por %p111, %p112
      %p114 = scmp.ne.s32.totalorder %s106, %s109
      %p115 = scmp.eq.s32.totalorder %s16, 0
      %p116 = por %p114, %p115
      %p117 = scmp.ne.s32.totalorder %s106, %s109
      %p118 = scmp.eq.s32.totalorder %s21, 1
      %p119 = por %p117, %p118
      %p120 = scmp.ne.s32.totalorder %s109, %s110
      %p121 = scmp.eq.s32.totalorder %s21, 0
      %p122 = por %p120, %p121
      %p123 = scmp.ne.s32.totalorder %s109, %s110
      %p124 = scmp.eq.s32.totalorder %s22, 1
      %p125 = por %p123, %p124
      %p127 = scmp.ne.s32.totalorder %s110, %s126
      %p128 = scmp.eq.s32.totalorder %s22, 0
      %p129 = por %p127, %p128
      %s130 = ssub.s32 %s24, %s31
      %p131 = scmp.eq.s32.totalorder %s130, 0
      %s133 = sadd.s32 %s132, 1
      %s134 = scalar_select %p131, %s132, %s133
      %p137 = pneg %p131
      %p138 = scmp.eq.s32.totalorder %s16, 1
      %p139 = por %p137, %p138
      %p140 = scmp.ne.s32.totalorder %s132, %s135
      %p141 = scmp.eq.s32.totalorder %s16, 0
      %p142 = por %p140, %p141
      %p143 = scmp.ne.s32.totalorder %s132, %s135
      %p144 = scmp.eq.s32.totalorder %s21, 1
      %p145 = por %p143, %p144
      %p146 = scmp.ne.s32.totalorder %s135, %s136
      %p147 = scmp.eq.s32.totalorder %s21, 0
      %p148 = por %p146, %p147
      %p149 = scmp.ne.s32.totalorder %s135, %s136
      %p150 = scmp.eq.s32.totalorder %s22, 1
      %p151 = por %p149, %p150
      %p153 = scmp.ne.s32.totalorder %s136, %s152
      %p154 = scmp.eq.s32.totalorder %s22, 0
      %p155 = por %p153, %p154
      %s156 = ssub.s32 %s24, %s31
      %p157 = scmp.eq.s32.totalorder %s156, 0
      %s159 = sadd.s32 %s158, 1
      %s160 = scalar_select %p157, %s158, %s159
      %p163 = pneg %p157
      %p164 = scmp.eq.s32.totalorder %s16, 1
      %p165 = por %p163, %p164
      %p166 = scmp.ne.s32.totalorder %s158, %s161
      %p167 = scmp.eq.s32.totalorder %s16, 0
      %p168 = por %p166, %p167
      %p169 = scmp.ne.s32.totalorder %s158, %s161
      %p170 = scmp.eq.s32.totalorder %s21, 1
      %p171 = por %p169, %p170
      %p172 = scmp.ne.s32.totalorder %s161, %s162
      %p173 = scmp.eq.s32.totalorder %s21, 0
      %p174 = por %p172, %p173
      %p175 = scmp.ne.s32.totalorder %s161, %s162
      %p176 = scmp.eq.s32.totalorder %s22, 1
      %p177 = por %p175, %p176
      %p179 = scmp.ne.s32.totalorder %s162, %s178
      %p180 = scmp.eq.s32.totalorder %s22, 0
      %p181 = por %p179, %p180
      %s183 = sadd.s32 %s182, 1
      %p186 = scmp.eq.s32.totalorder %s16, 1
      %p187 = scmp.ne.s32.totalorder %s182, %s184
      %p188 = scmp.eq.s32.totalorder %s16, 0
      %p189 = por %p187, %p188
      %p190 = scmp.ne.s32.totalorder %s182, %s184
      %p191 = scmp.eq.s32.totalorder %s21, 1
      %p192 = por %p190, %p191
      %p193 = scmp.ne.s32.totalorder %s184, %s185
      %p194 = scmp.eq.s32.totalorder %s21, 0
      %p195 = por %p193, %p194
      %p196 = scmp.ne.s32.totalorder %s184, %s185
      %p197 = scmp.eq.s32.totalorder %s22, 1
      %p198 = por %p196, %p197
      %p200 = scmp.ne.s32.totalorder %s185, %s199
      %p201 = scmp.eq.s32.totalorder %s22, 0
      %p202 = por %p200, %p201
      %s203 = ssub.s32 %s23, %s35
      %p204 = scmp.eq.s32.totalorder %s203, 0
      %s206 = sadd.s32 %s205, 1
      %s207 = scalar_select %p204, %s205, %s206
      %p210 = pneg %p204
      %p211 = scmp.eq.s32.totalorder %s16, 1
      %p212 = por %p210, %p211
      %p213 = scmp.ne.s32.totalorder %s205, %s208
      %p214 = scmp.eq.s32.totalorder %s16, 0
      %p215 = por %p213, %p214
      %p216 = scmp.ne.s32.totalorder %s205, %s208
      %p217 = scmp.eq.s32.totalorder %s21, 1
      %p218 = por %p216, %p217
      %p219 = scmp.ne.s32.totalorder %s208, %s209
      %p220 = scmp.eq.s32.totalorder %s21, 0
      %p221 = por %p219, %p220
      %p222 = scmp.ne.s32.totalorder %s208, %s209
      %p223 = scmp.eq.s32.totalorder %s22, 1
      %p224 = por %p222, %p223
      %p226 = scmp.ne.s32.totalorder %s209, %s225
      %p227 = scmp.eq.s32.totalorder %s22, 0
      %p228 = por %p226, %p227
      %p229 = scmp.le.s32.totalorder 1, %s16
      %p230 = scmp.lt.s32.totalorder %s16, 3
      %p231 = pnand %p229, %p230
      %p232 = pneg %p231
      // Predicated region
      $region9: #{tpu_custom_call.1} parent=5 // pred_check
        _
      $region10: #{tpu_custom_call.1} parent=5 // pred_check_branch
        %234 = sbr.rel (%p231) target = $region12
      $region11: #{tpu_custom_call.1} parent=5 // pred_region
        %s235 = ssub.s32 %s16, 1
        // Predicated region
        $region13: #{tpu_custom_call.1} parent=11 // pred_check
          %p236 = pneg %p75
        $region14: #{tpu_custom_call.1} parent=11 // pred_check_branch
          %238 = sbr.rel (%p236) target = $region16
        $region15: #{tpu_custom_call.1} parent=11 // pred_region
          _
        $region16: #{tpu_custom_call.1} parent=11 // pred_fallthru
          _
        // Predicated region
        $region17: #{tpu_custom_call.1} parent=11 // pred_check
          %p239 = pneg %p96
        $region18: #{tpu_custom_call.1} parent=11 // pred_check_branch
          %241 = sbr.rel (%p239) target = $region20
        $region19: #{tpu_custom_call.1} parent=11 // pred_region
          _
        $region20: #{tpu_custom_call.1} parent=11 // pred_fallthru
          _
        // Predicated region
        $region21: #{tpu_custom_call.1} parent=11 // pred_check
          %p242 = pneg %p122
        $region22: #{tpu_custom_call.1} parent=11 // pred_check_branch
          %244 = sbr.rel (%p242) target = $region24
        $region23: #{tpu_custom_call.1} parent=11 // pred_region
          %p245 = scmp.lt.s32.totalorder %s26, 0
          %s246 = scalar_select %p245, %s26, 0
          %s247 = smul.addr %s246, 8
          %s248 = scalar_lea.vmem %s3, %s247
        $region24: #{tpu_custom_call.1} parent=11 // pred_fallthru
          _
        // Predicated region
        $region25: #{tpu_custom_call.1} parent=11 // pred_check
          %p249 = pneg %p148
        $region26: #{tpu_custom_call.1} parent=11 // pred_check_branch
          %251 = sbr.rel (%p249) target = $region28
        $region27: #{tpu_custom_call.1} parent=11 // pred_region
          %p252 = scmp.lt.s32.totalorder %s26, 0
          %s253 = scalar_select %p252, %s26, 0
          %s254 = scalar_lea.vmem %s4, %s253
        $region28: #{tpu_custom_call.1} parent=11 // pred_fallthru
          _
        // Predicated region
        $region29: #{tpu_custom_call.1} parent=11 // pred_check
          %p255 = pneg %p174
        $region30: #{tpu_custom_call.1} parent=11 // pred_check_branch
          %257 = sbr.rel (%p255) target = $region32
        $region31: #{tpu_custom_call.1} parent=11 // pred_region
          %s258 = smul.u32 8, %s26
          %p259 = scmp.lt.s32.totalorder %s258, 7
          %s260 = scalar_select %p259, %s258, 7
          %s261 = smul.addr %s260, 8
          %s262 = scalar_lea.vmem %s5, %s261
          %s263 = smul.u32 8, %s26
        $region32: #{tpu_custom_call.1} parent=11 // pred_fallthru
          _
        // Predicated region
        $region33: #{tpu_custom_call.1} parent=11 // pred_check
          %p264 = pneg %p195
        $region34: #{tpu_custom_call.1} parent=11 // pred_check_branch
          %266 = sbr.rel (%p264) target = $region36
        $region35: #{tpu_custom_call.1} parent=11 // pred_region
          _
        $region36: #{tpu_custom_call.1} parent=11 // pred_fallthru
          _
      $region12: #{tpu_custom_call.1} parent=5 // pred_fallthru
        _
      %p267 = scmp.lt.s32.totalorder %s16, 2
      // Predicated region
      $region37: #{tpu_custom_call.1} parent=5 // pred_check
        %p268 = pneg %p267
      $region38: #{tpu_custom_call.1} parent=5 // pred_check_branch
        %270 = sbr.rel (%p268) target = $region40
      $region39: #{tpu_custom_call.1} parent=5 // pred_region
        // Predicated region
        $region41: #{tpu_custom_call.1} parent=39 // pred_check
          %p271 = pneg %p48
        $region42: #{tpu_custom_call.1} parent=39 // pred_check_branch
          %273 = sbr.rel (%p271) target = $region44
        $region43: #{tpu_custom_call.1} parent=39 // pred_region
          %p274 = scmp.lt.s32.totalorder %s23, 1
          %s275 = scalar_select %p274, %s23, 1
          %s276 = smul.addr %s275, 8
          %s277 = scalar_lea.vmem %s0, %s276
        $region44: #{tpu_custom_call.1} parent=39 // pred_fallthru
          _
      $region40: #{tpu_custom_call.1} parent=5 // pred_fallthru
        _
      %p278 = scmp.le.s32.totalorder 1, %s16
      %p279 = scmp.lt.s32.totalorder %s16, 3
      %p280 = pnand %p278, %p279
      %p281 = pneg %p280
      // Predicated region
      $region45: #{tpu_custom_call.1} parent=5 // pred_check
        _
      $region46: #{tpu_custom_call.1} parent=5 // pred_check_branch
        %283 = sbr.rel (%p280) target = $region48
      $region47: #{tpu_custom_call.1} parent=5 // pred_region
        %s284 = ssub.s32 %s16, 1
        %p285 = scmp.lt.s32.totalorder %s25, 1
        %s286 = scalar_select %p285, %s25, 1
        %s287 = smul.addr %s286, 8
        %s288 = scalar_lea.vmem %s0, %s287
        %p289 = pneg %p54
        %p290 = pneg %p51
        %p291 = pneg %p75
        %p292 = pneg %p72
        %p293 = pneg %p96
        %p294 = pneg %p93
        %p295 = scmp.lt.s32.totalorder %s26, 0
        %s296 = scalar_select %p295, %s26, 0
        %s297 = smul.addr %s296, 8
        %s298 = scalar_lea.vmem %s3, %s297
        %p299 = pneg %p122
        %p300 = pneg %p119
        %p301 = scmp.lt.s32.totalorder %s26, 0
        %s302 = scalar_select %p301, %s26, 0
        %s303 = scalar_lea.vmem %s4, %s302
        %p304 = pneg %p148
        %p305 = pneg %p145
        %s306 = smul.u32 8, %s26
        %p307 = scmp.lt.s32.totalorder %s306, 7
        %s308 = scalar_select %p307, %s306, 7
        %s309 = smul.addr %s308, 8
        %s310 = scalar_lea.vmem %s5, %s309
        %p311 = pneg %p174
        %p312 = pneg %p171
        %p313 = pneg %p195
        %p314 = pneg %p192
        %p315 = pneg %p221
        %p316 = pneg %p218
        %s317 = sand.u32 %s208, 1
        %s318 = scalar_lea.sflag [#allocation5], %s317
        %s319 = sand.u32 %s208, 1
        %s320 = smul.addr %s319, 8
        %s321 = scalar_lea.vmem [#allocation4], %s320
        %p322 = scmp.lt.s32.totalorder %s25, 1
        %s323 = scalar_select %p322, %s25, 1
        %s324 = smul.addr %s323, 8
        %s325 = scalar_lea.vmem %s0, %s324
        %p326 = scmp.lt.s32.totalorder %s26, 0
        %s327 = scalar_select %p326, %s26, 0
        %s328 = smul.addr %s327, 8
        %s329 = scalar_lea.vmem %s3, %s328
        %p330 = scmp.lt.s32.totalorder %s26, 0
        %s331 = scalar_select %p330, %s26, 0
        %s332 = scalar_lea.vmem %s4, %s331
        %s333 = smul.u32 8, %s26
        %p334 = scmp.lt.s32.totalorder %s333, 7
        %s335 = scalar_select %p334, %s333, 7
        %s336 = smul.addr %s335, 8
        %s337 = scalar_lea.vmem %s5, %s336
        %s338 = smul.u32 8, %s26
        %p339 = scmp.eq.s32.totalorder %s26, 0
        // Predicated region
        $region49: #{tpu_custom_call.1} parent=47 // pred_check
          %p340 = pneg %p339
        $region50: #{tpu_custom_call.1} parent=47 // pred_check_branch
          %342 = sbr.rel (%p340) target = $region52
        $region51: #{tpu_custom_call.1} parent=47 // pred_region
          %v343 = vld [vmem:[%s325] sm:$0xff]
          %vm344 = vcmask 261120
          %v345 = vsel %vm344, %v343, 0.0
          %346 = vadd.xlane.f32.xlu0 %v345
          %v347 = vpop.xlane.xlu0 %346
          %v348 = vrcp.pop 32.0
          %v349 = vmul.f32 %v347, %v348
          %v350 = vsub.f32 %v343, %v349
          %v351 = vmul.f32 %v350, %v350
          %v352 = vsel %vm344, %v351, 0.0
          %353 = vadd.xlane.f32.xlu0 %v352
          %v354 = vpop.xlane.xlu0 %353
          %v355 = vmul.f32 %v354, %v348
          %v356 = vadd.f32 %v355, 1e-05
          %v357 = vrsqrt.pop %v356
          %v358 = vmul.f32 %v350, %v357
          %v359 = vld [vmem:[%s1] sm:$0x1]
          %v361 = vlaneseq
          %v362 = vshrl.u32 %v361, 7
          %v363 = vsub.s32 0, %v362
          %v364 = vrot.slane %v359, %v363
          %v366 = vmul.f32 %v358, %v364
          %v367 = vld [vmem:[%s2] sm:$0x1]
          %v369 = vlaneseq
          %v370 = vshrl.u32 %v369, 7
          %v371 = vsub.s32 0, %v370
          %v372 = vrot.slane %v367, %v371
          %v374 = vadd.f32 %v366, %v372
          %375 = vst.msk [vmem:[#allocation2] sm:$0xff] %vm344, %v374
          %376 = vst.msk [vmem:[#allocation3] sm:$0xff] %vm344, 0.0
        $region52: #{tpu_custom_call.1} parent=47 // pred_fallthru
          _
        %v377 = vld [vmem:[#allocation2] sm:$0xff]
        %v378 = vld [vmem:[%s329] sm:$0xff]
        %v379 = vld [vmem:[%s329 + $0x8] sm:$0xff]
        %v380 = vld [vmem:[%s329 + $0x10] sm:$0xff]
        %v381 = vld [vmem:[%s329 + $0x18] sm:$0xff]
        %v382 = vld [vmem:[%s332] sm:$0x1]
        %v384 = vlaneseq
        %v385 = vshrl.u32 %v384, 7
        %v386 = vsub.s32 0, %v385
        %v387 = vrot.slane %v382, %v386
        %vm389 = vcmask 261120
        %v391 = vsel %vm389, %v377, 0
        %393 = vmatprep.subr.mxu0 0.0
        %394 = vmatpush1.msra.mxu0 %v378
        %395 = vmatprep.subr.mxu0 0.0
        %396 = vmatpush1.msra.mxu0 %v379
        %397 = vmatprep.subr.mxu0 0.0
        %398 = vmatpush1.msra.mxu0 %v380
        %399 = vmatprep.subr.mxu0 0.0
        %400 = vmatpush1.msra.mxu0 %v381
        %401 = vmatprep.subr.mxu0 0.0
        %402 = vmatpush1.msra.mxu0 0.0
        %403 = vmatprep.subr.mxu0 0.0
        %404 = vmatpush1.msra.mxu0 0.0
        %405 = vmatprep.subr.mxu0 0.0
        %406 = vmatpush1.msra.mxu0 0.0
        %407 = vmatprep.subr.mxu0 0.0
        %408 = vmatpush1.msra.mxu0 0.0
        %409 = vmatprep.subr.mxu0 0.0
        %410 = vmatpush1.msra.mxu0 0.0
        %411 = vmatprep.subr.mxu0 0.0
        %412 = vmatpush1.msra.mxu0 0.0
        %413 = vmatprep.subr.mxu0 0.0
        %414 = vmatpush1.msra.mxu0 0.0
        %415 = vmatprep.subr.mxu0 0.0
        %416 = vmatpush1.msra.mxu0 0.0
        %417 = vmatprep.subr.mxu0 0.0
        %418 = vmatpush1.msra.mxu0 0.0
        %419 = vmatprep.subr.mxu0 0.0
        %420 = vmatpush1.msra.mxu0 0.0
        %421 = vmatprep.subr.mxu0 0.0
        %422 = vmatpush1.msra.mxu0 0.0
        %423 = vmatprep.subr.mxu0 0.0
        %424 = vmatpush1.msra.mxu0 0.0
        %425 = vmatprep.subr.mxu0 0.0
        %426 = vmatpush1.msra.mxu0 0.0
        %427 = vmatprep.subr.mxu0 0.0
        %428 = vmatpush1.msra.mxu0 0.0
        %429 = vmatprep.subr.mxu0 0.0
        %430 = vmatpush1.msra.mxu0 0.0
        %431 = vmatprep.subr.mxu0 0.0
        %432 = vmatpush1.msra.mxu0 0.0
        %433 = vmatprep.subr.mxu0 0.0
        %434 = vmatpush1.msra.mxu0 0.0
        %435 = vmatprep.subr.mxu0 0.0
        %436 = vmatpush1.msra.mxu0 0.0
        %437 = vmatprep.subr.mxu0 0.0
        %438 = vmatpush1.msra.mxu0 0.0
        %439 = vmatprep.subr.mxu0 0.0
        %440 = vmatpush1.msra.mxu0 0.0
        %441 = vmatprep.subr.mxu0 0.0
        %442 = vmatpush1.msra.mxu0 0.0
        %443 = vmatprep.subr.mxu0 0.0
        %444 = vmatpush1.msra.mxu0 0.0
        %445 = vmatprep.subr.mxu0 0.0
        %446 = vmatpush1.msra.mxu0 0.0
        %447 = vmatprep.subr.mxu0 0.0
        %448 = vmatpush1.msra.mxu0 0.0
        %449 = vmatprep.subr.mxu0 0.0
        %450 = vmatpush1.msra.mxu0 0.0
        %451 = vmatprep.subr.mxu0 0.0
        %452 = vmatpush1.msra.mxu0 0.0
        %453 = vmatprep.subr.mxu0 0.0
        %454 = vmatpush1.msra.mxu0 0.0
        %455 = vmatprep.subr.mxu0 0.0
        %456 = vmatpush1.msra.mxu0 0.0
        %457 = vmatprep.mubr.f32.mxu0 0.0
        %458 = vmatmul.mubr.f32.gmra.mrb[0].mxu0 %v391
        %v459 = vpop.f32.mrb[0].mxu0
        %v460 = vadd.f32 %v387, %v459
        %v461 = vpop.f32.mrb[0].mxu0
        %462 = vdwg.mxu0
        %v463 = vmul.f32 %v460, %v460
        %v464 = vmul.f32 %v460, %v463
        %v465 = vmul.f32 %v464, 0.044715
        %v466 = vadd.f32 %v460, %v465
        %v467 = vmul.f32 %v466, 0.7978846
        %v468 = vtanh.pop %v467
        %v469 = vadd.f32 %v468, 1.0
        %v470 = vmul.f32 %v469, 0.5
        %v471 = vmul.f32 %v460, %v470
        %v472 = vld [vmem:[#allocation3] sm:$0xff]
        %v473 = vld [vmem:[%s337] sm:$0xff]
        %v474 = vld [vmem:[%s337 + $0x8] sm:$0xff]
        %v475 = vld [vmem:[%s337 + $0x10] sm:$0xff]
        %v476 = vld [vmem:[%s337 + $0x18] sm:$0xff]
        %v477 = vld [vmem:[%s337 + $0x20] sm:$0xff]
        %v478 = vld [vmem:[%s337 + $0x28] sm:$0xff]
        %v479 = vld [vmem:[%s337 + $0x30] sm:$0xff]
        %v480 = vld [vmem:[%s337 + $0x38] sm:$0xff]
        %vm481 = vcmask 523264
        %v483 = vsel %vm481, %v471, 0
        %485 = vmatprep.subr.mxu0 0.0
        %486 = vmatpush1.msra.mxu0 %v473
        %487 = vmatprep.subr.mxu0 0.0
        %488 = vmatpush1.msra.mxu0 %v474
        %489 = vmatprep.subr.mxu0 0.0
        %490 = vmatpush1.msra.mxu0 %v475
        %491 = vmatprep.subr.mxu0 0.0
        %492 = vmatpush1.msra.mxu0 %v476
        %493 = vmatprep.subr.mxu0 0.0
        %494 = vmatpush1.msra.mxu0 %v477
        %495 = vmatprep.subr.mxu0 0.0
        %496 = vmatpush1.msra.mxu0 %v478
        %497 = vmatprep.subr.mxu0 0.0
        %498 = vmatpush1.msra.mxu0 %v479
        %499 = vmatprep.subr.mxu0 0.0
        %500 = vmatpush1.msra.mxu0 %v480
        %501 = vmatprep.subr.mxu0 0.0
        %502 = vmatpush1.msra.mxu0 0.0
        %503 = vmatprep.subr.mxu0 0.0
        %504 = vmatpush1.msra.mxu0 0.0
        %505 = vmatprep.subr.mxu0 0.0
        %506 = vmatpush1.msra.mxu0 0.0
        %507 = vmatprep.subr.mxu0 0.0
        %508 = vmatpush1.msra.mxu0 0.0
        %509 = vmatprep.subr.mxu0 0.0
        %510 = vmatpush1.msra.mxu0 0.0
        %511 = vmatprep.subr.mxu0 0.0
        %512 = vmatpush1.msra.mxu0 0.0
        %513 = vmatprep.subr.mxu0 0.0
        %514 = vmatpush1.msra.mxu0 0.0
        %515 = vmatprep.subr.mxu0 0.0
        %516 = vmatpush1.msra.mxu0 0.0
        %517 = vmatprep.subr.mxu0 0.0
        %518 = vmatpush1.msra.mxu0 0.0
        %519 = vmatprep.subr.mxu0 0.0
        %520 = vmatpush1.msra.mxu0 0.0
        %521 = vmatprep.subr.mxu0 0.0
        %522 = vmatpush1.msra.mxu0 0.0
        %523 = vmatprep.subr.mxu0 0.0
        %524 = vmatpush1.msra.mxu0 0.0
        %525 = vmatprep.subr.mxu0 0.0
        %526 = vmatpush1.msra.mxu0 0.0
        %527 = vmatprep.subr.mxu0 0.0
        %528 = vmatpush1.msra.mxu0 0.0
        %529 = vmatprep.subr.mxu0 0.0
        %530 = vmatpush1.msra.mxu0 0.0
        %531 = vmatprep.subr.mxu0 0.0
        %532 = vmatpush1.msra.mxu0 0.0
        %533 = vmatprep.subr.mxu0 0.0
        %534 = vmatpush1.msra.mxu0 0.0
        %535 = vmatprep.subr.mxu0 0.0
        %536 = vmatpush1.msra.mxu0 0.0
        %537 = vmatprep.subr.mxu0 0.0
        %538 = vmatpush1.msra.mxu0 0.0
        %539 = vmatprep.subr.mxu0 0.0
        %540 = vmatpush1.msra.mxu0 0.0
        %541 = vmatprep.subr.mxu0 0.0
        %542 = vmatpush1.msra.mxu0 0.0
        %543 = vmatprep.subr.mxu0 0.0
        %544 = vmatpush1.msra.mxu0 0.0
        %545 = vmatprep.subr.mxu0 0.0
        %546 = vmatpush1.msra.mxu0 0.0
        %547 = vmatprep.subr.mxu0 0.0
        %548 = vmatpush1.msra.mxu0 0.0
        %549 = vmatprep.mubr.f32.mxu0 0.0
        %550 = vmatmul.mubr.f32.gmra.mrb[0].mxu0 %v483
        %v551 = vpop.f32.mrb[0].mxu0
        %v552 = vadd.f32 0.0, %v551
        %v553 = vpop.f32.mrb[0].mxu0
        %554 = vdwg.mxu0
        %v555 = vadd.f32 %v472, %v552
        %556 = vst.msk [vmem:[#allocation3] sm:$0xff] %vm389, %v555
        // Predicated region
        $region53: #{tpu_custom_call.1} parent=47 // pred_check
          %p557 = pneg %p339
        $region54: #{tpu_custom_call.1} parent=47 // pred_check_branch
          %559 = sbr.rel (%p557) target = $region56
        $region55: #{tpu_custom_call.1} parent=47 // pred_region
          %v560 = vld [vmem:[#allocation3] sm:$0xff]
          %v561 = vld [vmem:[%s6] sm:$0x1]
          %v563 = vlaneseq
          %v564 = vshrl.u32 %v563, 7
          %v565 = vsub.s32 0, %v564
          %v566 = vrot.slane %v561, %v565
          %v568 = vadd.f32 %v560, %v566
          %569 = vst.msk [vmem:[%s321] sm:$0xff] %vm389, %v568
        $region56: #{tpu_custom_call.1} parent=47 // pred_fallthru
          _
        %s570 = sand.u32 %s208, 1
        %s571 = scalar_lea.sflag [#allocation5], %s570
        %s572 = sand.u32 %s208, 1
        %s573 = smul.addr %s572, 8
        %s574 = scalar_lea.vmem [#allocation4], %s573
        // Predicated region
        $region57: #{tpu_custom_call.1} parent=47 // pred_check
          %p575 = pneg %p218
        $region58: #{tpu_custom_call.1} parent=47 // pred_check_branch
          %577 = sbr.rel (%p575) target = $region60
        $region59: #{tpu_custom_call.1} parent=47 // pred_region
          %s579 = ssub.s32 128, 128
          %580 = vsyncadd %s571, %s579
          %s581 = smul.addr %s25, 128
          %s582 = scalar_lea.hbm %s7, %s581
          %s584 = sshll.u32 %s574, 4
          %s585 = int_to_ptr.vmem [resolvable:$true] %s584
          %587 = dma.vmem_to_hbm [thread:$0]  %s585, 128, %s582, %s571
        $region60: #{tpu_custom_call.1} parent=47 // pred_fallthru
          _
      $region48: #{tpu_custom_call.1} parent=5 // pred_fallthru
        _
      %p588 = scmp.le.s32.totalorder 2, %s16
      // Predicated region
      $region61: #{tpu_custom_call.1} parent=5 // pred_check
        %p589 = pneg %p588
      $region62: #{tpu_custom_call.1} parent=5 // pred_check_branch
        %591 = sbr.rel (%p589) target = $region64
      $region63: #{tpu_custom_call.1} parent=5 // pred_region
        %s592 = ssub.s32 %s16, 2
        // Predicated region
        $region65: #{tpu_custom_call.1} parent=63 // pred_check
          %p593 = pneg %p224
        $region66: #{tpu_custom_call.1} parent=63 // pred_check_branch
          %595 = sbr.rel (%p593) target = $region68
        $region67: #{tpu_custom_call.1} parent=63 // pred_region
          %s596 = sand.u32 %s209, 1
          %s597 = scalar_lea.sflag [#allocation5], %s596
          %s598 = sand.u32 %s209, 1
          %s599 = smul.addr %s598, 8
          %s600 = scalar_lea.vmem [#allocation4], %s599
          %601 = dma.done %s597, 128
        $region68: #{tpu_custom_call.1} parent=63 // pred_fallthru
          _
      $region64: #{tpu_custom_call.1} parent=5 // pred_fallthru
        _
    $region6: #{tpu_custom_call.1} parent=1 // loop_footer
      %s20 = sadd.s32 1, %s16
    $region7: #{tpu_custom_call.1} parent=1 // loop_footer_branch
      %15 = sbr.rel target = $region3
    $region8: #{tpu_custom_call.1} parent=1 // loop_exit
      _
    %602 = vsyncpa [#allocation5], 1
    %s603 = scalar_lea.sflag [#allocation5], 1
    %604 = vsyncpa %s603, 1

</llo_original>
